<compile_context>
chip_gen: v6e
topology: v6e:2x2x1
jax: 0.10.0
libtpu: 0.0.40
codegen_flags: <defaults>
</compile_context>

<pallas_src>
import jax
import jax.numpy as jnp
from jax.experimental import pallas as pl
from jax.experimental.pallas import tpu as pltpu


def _round_up(n, m):
    return ((n + m - 1) // m) * m


def _make_kernel(FE, E, d1):
    def kernel(a_ref, wcat_ref, w2_ref, b2_ref, w3_ref, out_ref):
        # a_ref    : (Kp, TB) streamed: rows [0,FE) = emb^T, [FE,FE+F) = fc^T,
        #            row FE+F = ones, remaining rows zero padding (matmul dtype)
        # wcat_ref : (C, Kp) pinned fused RHS^T:
        #            rows [0,d1)    -> [ W1^T  | 0   | b1        ]
        #            rows [d1,d1+E) -> [ Sel^T | 0   | 0         ]  (field-sum)
        #            row  d1+E      -> [ 0     | 1_F | bias + b3 ]
        # w2_ref   : (d2, d1) pinned W2^T (matmul dtype)
        # b2_ref   : (d2, 1)  pinned bias column (f32)
        # w3_ref   : (d2, 1)  pinned final-projection column (f32)
        # out_ref  : (1, TB)  lane-dense output row (f32)
        a = a_ref[...]                                               # (Kp, TB)

        # Single fused MXU pass: first MLP layer, FM field-sum and the
        # (fc-sum + bias + b3) row all share the same streamed LHS tile.
        r = jnp.dot(wcat_ref[...], a, preferred_element_type=jnp.float32)
        h1 = jnp.maximum(r[:d1, :], 0.0)                             # (d1, TB)
        s = r[d1:d1 + E, :]                                          # (E,  TB)
        base = r[d1 + E:d1 + E + 1, :]                               # (1,  TB)

        # FM second-order term; axis-0 reductions are cheap sublane reduces
        # in the batch-on-lanes layout.
        emb = a[:FE, :].astype(jnp.float32)                          # (FE, TB)
        sum_of_square = jnp.sum(emb * emb, axis=0, keepdims=True)    # (1, TB)
        square_of_sum = jnp.sum(s * s, axis=0, keepdims=True)        # (1, TB)
        inter = 0.5 * (square_of_sum - sum_of_square)

        # Remaining MLP: Linear -> ReLU -> [Dropout = id] -> Linear(N=1).
        h2 = jnp.dot(w2_ref[...], h1.astype(w2_ref.dtype),
                     preferred_element_type=jnp.float32)             # (d2, TB)
        h2 = jnp.maximum(h2 + b2_ref[...], 0.0)
        mlp = jnp.sum(h2 * w3_ref[...], axis=0, keepdims=True)       # (1, TB)

        out_ref[...] = jax.nn.sigmoid(base + inter + mlp)
    return kernel


def init_params(key, total_input_dim, num_fields, embedding_dim, mlp_dims):
    ks = jax.random.split(key, 8)
    flat_dim = num_fields * embedding_dim
    d1, d2 = mlp_dims
    return {
        "bias": jnp.zeros((1,), jnp.float32),
        "fc": 0.1 * jax.random.normal(ks[0], (total_input_dim, 1), jnp.float32),
        "embedding": 0.1 * jax.random.normal(ks[1], (total_input_dim, embedding_dim),
                                             jnp.float32),
        "w1": 0.1 * jax.random.normal(ks[2], (flat_dim, d1), jnp.float32),
        "b1": 0.01 * jax.random.normal(ks[3], (d1,), jnp.float32),
        "w2": 0.1 * jax.random.normal(ks[4], (d1, d2), jnp.float32),
        "b2": 0.01 * jax.random.normal(ks[5], (d2,), jnp.float32),
        "w3": 0.1 * jax.random.normal(ks[6], (d2, 1), jnp.float32),
        "b3": 0.01 * jax.random.normal(ks[7], (1,), jnp.float32),
    }


def deepfm_forward(x, params, *, matmul_dtype=jnp.bfloat16, tile_b=8192):
    """x: int32 (B, num_fields) index tensor.  Returns f32 (B,)."""
    B, F = x.shape
    E = params["embedding"].shape[1]
    FE = F * E
    d1 = params["w1"].shape[1]
    d2 = params["w2"].shape[1]

    # ---- gathers (XLA glue) ---------------------------------------------
    # TODO(synk): fuse the embedding/fc gather into the kernel to remove this
    # HBM round trip (stream only the int32 indices, pin the tiny tables).
    emb_t = params["embedding"][x].reshape(B, FE).T          # (FE, B)
    fc_t = params["fc"][x][..., 0].T                         # (F,  B)
    ones = jnp.ones((1, B), jnp.float32)
    a = jnp.concatenate([emb_t, fc_t, ones], axis=0)         # (K,  B)
    K = FE + F + 1
    Kp = _round_up(K, 8)                                     # sublane align
    C = d1 + E + 1

    # ---- batch tiling: lanes carry the batch ------------------------------
    TB = max(128, min(int(tile_b), _round_up(B, 128)))
    Bp = _round_up(B, TB)
    a = jnp.pad(a, ((0, Kp - K), (0, Bp - B))).astype(matmul_dtype)

    # ---- fused pinned RHS^T (C, Kp) ---------------------------------------
    sel_t = (jnp.arange(E, dtype=jnp.int32)[:, None]
             == (jnp.arange(FE, dtype=jnp.int32)[None, :] % E)).astype(jnp.float32)
    row_h1 = jnp.concatenate(
        [params["w1"].T, jnp.zeros((d1, F), jnp.float32),
         params["b1"].reshape(d1, 1)], axis=1)                         # (d1, K)
    row_s = jnp.concatenate(
        [sel_t, jnp.zeros((E, F + 1), jnp.float32)], axis=1)           # (E,  K)
    row_lin = jnp.concatenate(
        [jnp.zeros((1, FE), jnp.float32), jnp.ones((1, F), jnp.float32),
         (params["bias"] + params["b3"]).reshape(1, 1)], axis=1)       # (1,  K)
    wcat = jnp.concatenate([row_h1, row_s, row_lin], axis=0)           # (C,  K)
    wcat = jnp.pad(wcat, ((0, 0), (0, Kp - K))).astype(matmul_dtype)   # (C,  Kp)

    w2_t = params["w2"].T.astype(matmul_dtype)                         # (d2, d1)
    b2c = params["b2"].reshape(d2, 1).astype(jnp.float32)
    w3c = params["w3"].reshape(d2, 1).astype(jnp.float32)

    kernel = _make_kernel(FE, E, d1)
    out = pl.pallas_call(
        kernel,
        out_shape=jax.ShapeDtypeStruct((1, Bp), jnp.float32),
        grid=(pl.cdiv(Bp, TB),),
        in_specs=[
            pl.BlockSpec((Kp, TB), lambda i: (0, i)),   # activations (streamed)
            pl.BlockSpec((C, Kp), lambda i: (0, 0)),    # fused W1/sel/lin (pinned)
            pl.BlockSpec((d2, d1), lambda i: (0, 0)),   # W2^T (pinned)
            pl.BlockSpec((d2, 1), lambda i: (0, 0)),    # b2 column (pinned)
            pl.BlockSpec((d2, 1), lambda i: (0, 0)),    # w3 column (pinned)
        ],
        out_specs=pl.BlockSpec((1, TB), lambda i: (0, i)),
        compiler_params=pltpu.CompilerParams(
            dimension_semantics=("parallel",),
            vmem_limit_bytes=32 * 1024 * 1024,
        ),
    )(a, wcat, w2_t, b2c, w3c)
    return out[0, :B]


def deepfm_reference(x, params):
    """Pure-JAX reference mirroring the PyTorch forward (eval mode)."""
    emb3 = params["embedding"][x]
    fc = params["fc"][x]
    fm_y = params["bias"] + jnp.sum(fc, axis=1)                       # (B, 1)
    square_of_sum = jnp.sum(emb3, axis=1) ** 2
    sum_of_square = jnp.sum(emb3 ** 2, axis=1)
    fm_y = fm_y + 0.5 * jnp.sum(square_of_sum - sum_of_square, axis=1,
                                keepdims=True)
    h = emb3.reshape(emb3.shape[0], -1)
    h = jnp.maximum(h @ params["w1"] + params["b1"], 0.0)
    h = jnp.maximum(h @ params["w2"] + params["b2"], 0.0)
    mlp_y = h @ params["w3"] + params["b3"]
    return jax.nn.sigmoid(fm_y[:, 0] + mlp_y[:, 0])


if __name__ == "__main__":
    # Module config (small, consistent with DeepFM_renew.__init__)
    input_dims = [10, 20, 30, 40]          # 4 fields, total_input_dim = 100
    embedding_dim = 8
    mlp_dims = [32, 16]
    num_fields = len(input_dims)
    total_input_dim = int(sum(input_dims))

    key = jax.random.PRNGKey(0)
    kp, kx = jax.random.split(key)
    params = init_params(kp, total_input_dim, num_fields, embedding_dim, mlp_dims)

    B = 300   # non-multiple of 128: exercises the explicit batch-padding path
    x = jax.random.randint(kx, (B, num_fields), 0, total_input_dim, dtype=jnp.int32)
    y_ref = deepfm_reference(x, params)

    # f32 path, tile_b=128 -> 3 batch tiles (grid / pipelining / padding path).
    y32 = deepfm_forward(x, params, matmul_dtype=jnp.float32, tile_b=128)
    y32 = jax.block_until_ready(y32)
    assert y32.shape == (B,)
    assert jnp.allclose(y32, y_ref, atol=2e-5, rtol=2e-5), (y32, y_ref)

    # bf16 streaming/matmul path (recommended on v6e/v7x); f32 accumulation,
    # looser tolerance.
    ybf = deepfm_forward(x, params, tile_b=128)
    ybf = jax.block_until_ready(ybf)
    assert jnp.allclose(ybf, y_ref, atol=2e-2, rtol=2e-2), (ybf, y_ref)

    print("KERNEL_OK")
</pallas_src>

<mosaic_0001>
module attributes {stable_mosaic.version = 11 : i64} {
  func.func @kernel(%arg0: i32, %arg1: memref<40x128xf32, #tpu.memory_space<vmem>>, %arg2: memref<41x40xf32, #tpu.memory_space<vmem>>, %arg3: memref<16x32xf32, #tpu.memory_space<vmem>>, %arg4: memref<16x1xf32, #tpu.memory_space<vmem>>, %arg5: memref<16x1xf32, #tpu.memory_space<vmem>>, %arg6: memref<1x128xf32, #tpu.memory_space<vmem>>) attributes {dimension_semantics = [#tpu.dimension_semantics<parallel>], iteration_bounds = array<i64: 3>, scalar_prefetch = 0 : i64, scratch_operands = 0 : i64, tpu.core_type = #tpu.core_type<tc>, window_params = [{transform_indices = @transform_0, window_bounds = array<i64: 40, 128>}, {pipeline_mode = #tpu.pipeline_mode<synchronous>, transform_indices = @transform_1, window_bounds = array<i64: 41, 40>}, {pipeline_mode = #tpu.pipeline_mode<synchronous>, transform_indices = @transform_2, window_bounds = array<i64: 16, 32>}, {pipeline_mode = #tpu.pipeline_mode<synchronous>, transform_indices = @transform_3, window_bounds = array<i64: 16, 1>}, {pipeline_mode = #tpu.pipeline_mode<synchronous>, transform_indices = @transform_4, window_bounds = array<i64: 16, 1>}, {transform_indices = @transform_5, window_bounds = array<i64: 1, 128>}]} {
    %c0 = arith.constant 0 : index
    %c0_0 = arith.constant 0 : index
    %0 = vector.load %arg1[%c0, %c0_0] : memref<40x128xf32, #tpu.memory_space<vmem>>, vector<40x128xf32>
    %c0_1 = arith.constant 0 : index
    %c0_2 = arith.constant 0 : index
    %1 = vector.load %arg2[%c0_1, %c0_2] : memref<41x40xf32, #tpu.memory_space<vmem>>, vector<41x40xf32>
    %cst = arith.constant dense<0.000000e+00> : vector<41x128xf32>
    %2 = tpu.matmul %1, %0, %cst {dimension_numbers = #tpu.dot_dimension_numbers<[1], [0], [0], [1], [0, 0, 1, 1], [], []>} : vector<41x40xf32>, vector<40x128xf32>, vector<41x128xf32> -> vector<41x128xf32>
    %3 = vector.extract_strided_slice %2 {offsets = [0, 0], sizes = [32, 128], strides = [1, 1]} : vector<41x128xf32> to vector<32x128xf32>
    %cst_3 = arith.constant 0.000000e+00 : f32
    %4 = vector.broadcast %cst_3 : f32 to vector<32x128xf32>
    %5 = arith.maximumf %3, %4 : vector<32x128xf32>
    %6 = vector.extract_strided_slice %2 {offsets = [32, 0], sizes = [8, 128], strides = [1, 1]} : vector<41x128xf32> to vector<8x128xf32>
    %7 = vector.extract_strided_slice %2 {offsets = [40, 0], sizes = [1, 128], strides = [1, 1]} : vector<41x128xf32> to vector<1x128xf32>
    %8 = vector.extract_strided_slice %0 {offsets = [0, 0], sizes = [32, 128], strides = [1, 1]} : vector<40x128xf32> to vector<32x128xf32>
    %9 = arith.mulf %8, %8 : vector<32x128xf32>
    %cst_4 = arith.constant dense<0.000000e+00> : vector<128xf32>
    %10 = vector.multi_reduction <add>, %9, %cst_4 [0] : vector<32x128xf32> to vector<128xf32>
    %11 = vector.shape_cast %10 : vector<128xf32> to vector<1x128xf32>
    %12 = arith.mulf %6, %6 : vector<8x128xf32>
    %cst_5 = arith.constant dense<0.000000e+00> : vector<128xf32>
    %13 = vector.multi_reduction <add>, %12, %cst_5 [0] : vector<8x128xf32> to vector<128xf32>
    %14 = vector.shape_cast %13 : vector<128xf32> to vector<1x128xf32>
    %15 = arith.subf %14, %11 : vector<1x128xf32>
    %cst_6 = arith.constant 5.000000e-01 : f32
    %16 = vector.broadcast %cst_6 : f32 to vector<1x128xf32>
    %17 = arith.mulf %16, %15 : vector<1x128xf32>
    %c0_7 = arith.constant 0 : index
    %c0_8 = arith.constant 0 : index
    %18 = vector.load %arg3[%c0_7, %c0_8] : memref<16x32xf32, #tpu.memory_space<vmem>>, vector<16x32xf32>
    %cst_9 = arith.constant dense<0.000000e+00> : vector<16x128xf32>
    %19 = tpu.matmul %18, %5, %cst_9 {dimension_numbers = #tpu.dot_dimension_numbers<[1], [0], [0], [1], [0, 0, 1, 1], [], []>} : vector<16x32xf32>, vector<32x128xf32>, vector<16x128xf32> -> vector<16x128xf32>
    %c0_10 = arith.constant 0 : index
    %c0_11 = arith.constant 0 : index
    %20 = vector.load %arg4[%c0_10, %c0_11] : memref<16x1xf32, #tpu.memory_space<vmem>>, vector<16x1xf32>
    %21 = vector.broadcast %20 : vector<16x1xf32> to vector<16x128xf32>
    %22 = arith.addf %19, %21 : vector<16x128xf32>
    %cst_12 = arith.constant 0.000000e+00 : f32
    %23 = vector.broadcast %cst_12 : f32 to vector<16x128xf32>
    %24 = arith.maximumf %22, %23 : vector<16x128xf32>
    %c0_13 = arith.constant 0 : index
    %c0_14 = arith.constant 0 : index
    %25 = vector.load %arg5[%c0_13, %c0_14] : memref<16x1xf32, #tpu.memory_space<vmem>>, vector<16x1xf32>
    %26 = vector.broadcast %25 : vector<16x1xf32> to vector<16x128xf32>
    %27 = arith.mulf %24, %26 : vector<16x128xf32>
    %cst_15 = arith.constant dense<0.000000e+00> : vector<128xf32>
    %28 = vector.multi_reduction <add>, %27, %cst_15 [0] : vector<16x128xf32> to vector<128xf32>
    %29 = vector.shape_cast %28 : vector<128xf32> to vector<1x128xf32>
    %30 = arith.addf %7, %17 : vector<1x128xf32>
    %31 = arith.addf %30, %29 : vector<1x128xf32>
    %32 = arith.negf %31 : vector<1x128xf32>
    %33 = math.exp %32 : vector<1x128xf32>
    %cst_16 = arith.constant 1.000000e+00 : f32
    %34 = vector.broadcast %cst_16 : f32 to vector<1x128xf32>
    %35 = arith.addf %34, %33 : vector<1x128xf32>
    %36 = arith.divf %34, %35 : vector<1x128xf32>
    %c0_17 = arith.constant 0 : index
    %c0_18 = arith.constant 0 : index
    %37 = vector.load %arg6[%c0_17, %c0_18] : memref<1x128xf32, #tpu.memory_space<vmem>>, vector<1x128xf32>
    tpu.vector_store %arg6[%c0_17, %c0_18], %36 {strides = array<i32>} : memref<1x128xf32, #tpu.memory_space<vmem>>, vector<1x128xf32>,
    return
  }
  func.func @transform_0(%arg0: i32) -> (i32, i32) {
    %c0_i32 = arith.constant 0 : i32
    %c0_i32_0 = arith.constant 0 : i32
    return %c0_i32, %arg0 : i32, i32
  }
  func.func @transform_1(%arg0: i32) -> (i32, i32) {
    %c0_i32 = arith.constant 0 : i32
    %c0_i32_0 = arith.constant 0 : i32
    %c0_i32_1 = arith.constant 0 : i32
    return %c0_i32, %c0_i32_0 : i32, i32
  }
  func.func @transform_2(%arg0: i32) -> (i32, i32) {
    %c0_i32 = arith.constant 0 : i32
    %c0_i32_0 = arith.constant 0 : i32
    %c0_i32_1 = arith.constant 0 : i32
    return %c0_i32, %c0_i32_0 : i32, i32
  }
  func.func @transform_3(%arg0: i32) -> (i32, i32) {
    %c0_i32 = arith.constant 0 : i32
    %c0_i32_0 = arith.constant 0 : i32
    %c0_i32_1 = arith.constant 0 : i32
    return %c0_i32, %c0_i32_0 : i32, i32
  }
  func.func @transform_4(%arg0: i32) -> (i32, i32) {
    %c0_i32 = arith.constant 0 : i32
    %c0_i32_0 = arith.constant 0 : i32
    %c0_i32_1 = arith.constant 0 : i32
    return %c0_i32, %c0_i32_0 : i32, i32
  }
  func.func @transform_5(%arg0: i32) -> (i32, i32) {
    %c0_i32 = arith.constant 0 : i32
    %c0_i32_0 = arith.constant 0 : i32
    return %c0_i32, %arg0 : i32, i32
  }
}

</mosaic_0001>

<llo_original>
// kernel: tpu_custom_call.1
$region0: #{tpu_custom_call.1}
  #allocation0 [shape = 'u32[]', space=smem, size = 0x4, offset = 0x4, fixed_abs, tag = 'smem constant byte address 0x4 - core index']
  #allocation1 [shape = 'u32[144,128]{1,0:T(1,128)}', space=vmem, size = 0x12000, scoped, tag = 'internal scratch']
  %s0 = inlined_call_operand.vmem [shape: f32[40,384], index: 0, kind: input, shape index: {}]
  %s1 = inlined_call_operand.vmem [shape: f32[41,40], index: 1, kind: input, shape index: {}]
  %s2 = inlined_call_operand.hbm [shape: f32[16,32], index: 2, kind: input, shape index: {}]
  %s3 = inlined_call_operand.vmem [shape: f32[16,1], index: 3, kind: input, shape index: {}]
  %s4 = inlined_call_operand.vmem [shape: f32[16,1], index: 4, kind: input, shape index: {}]
  %s5 = inlined_call_operand.hbm [shape: f32[1,384], index: 5, kind: output, shape index: {}]
  %s6 = sld [smem:[#allocation0]]
  $region95: #{tpu_custom_call.1} parent=0
    _
  %s8 = ssub.s32 1, %s6
  %s9 = scalar_select 0, %s8, %s6
  $region1: #{tpu_custom_call.1} parent=0
    #allocation2 [shape = 'u8[40960]{0}', space=vmem, size = 0xa000, scoped, tag = 'input window, operand 0']
    #allocation3 [shape = 'u8[8192]{0}', space=vmem, size = 0x2000, scoped, tag = 'input window, operand 2, single buffered']
    #allocation4 [shape = 's32[2]{0}', space=sflag, size = 0x8, scoped, tag = 'scoped memory for tpu_custom_call.1']
    #allocation5 [shape = 's32[2]{0}', space=sflag, size = 0x8, scoped, tag = 'scoped memory for tpu_custom_call.1']
    #allocation6 [shape = 'u8[1024]{0}', space=vmem, size = 0x400, scoped, tag = 'output window, operand 0']
    %10 = vsyncpa [#allocation4], 0
    %11 = vsyncpa [#allocation5], 0
    %s12 = scalar_lea.sflag [#allocation5], 1
    %13 = vsyncpa %s12, 0
    loop: start=0, step=1, limit=5
    $region2: #{tpu_custom_call.1} parent=1 // loop_pre_header
      _
    $region3: #{tpu_custom_call.1} parent=1 // loop_header
      %s15 = sphi 0, %s19
      %p16 = scmp.ge.s32.totalorder %s15, 5
      %s25 = sphi 0, %s27
      %s28 = sphi 0, %s25
      %s29 = sphi 0, %s28
      %s45 = sphi 0, %s29
      %s49 = sphi 0, %s49
      %s51 = sphi 0, %s49
      %s52 = sphi 0, %s51
      %s66 = sphi 0, %s52
      %s70 = sphi 0, %s70
      %s72 = sphi 0, %s70
      %s73 = sphi 0, %s72
      %s87 = sphi 0, %s73
      %s91 = sphi 0, %s91
      %s93 = sphi 0, %s91
      %s94 = sphi 0, %s93
      %s108 = sphi 0, %s94
      %s112 = sphi 0, %s112
      %s114 = sphi 0, %s112
      %s115 = sphi 0, %s114
      %s129 = sphi 0, %s115
      %s135 = sphi 0, %s137
      %s138 = sphi 0, %s135
      %s139 = sphi 0, %s138
      %s155 = sphi 0, %s139
    $region4: #{tpu_custom_call.1} parent=1 // loop_header_branch
      %18 = sbr.rel (%p16) target = $region8
    $region5: #{tpu_custom_call.1} parent=1 // loop_body
      %s20 = ssub.s32 %s15, 1
      %s21 = ssub.s32 %s15, 2
      %s22 = sadd.s32 %s15, 1
      %s23 = ssub.s32 %s15, %s22
      %p24 = scmp.eq.s32.totalorder %s23, 0
      %s26 = sadd.s32 %s25, 1
      %s27 = scalar_select %p24, %s25, %s26
      %p30 = pneg %p24
      %p31 = scmp.eq.s32.totalorder %s15, 2
      %p32 = por %p30, %p31
      %p33 = scmp.ne.s32.totalorder %s25, %s28
      %p34 = scmp.eq.s32.totalorder %s15, 0
      %p35 = por %p33, %p34
      %p36 = scmp.ne.s32.totalorder %s25, %s28
      %p37 = scmp.eq.s32.totalorder %s20, 2
      %p38 = por %p36, %p37
      %p39 = scmp.ne.s32.totalorder %s28, %s29
      %p40 = scmp.eq.s32.totalorder %s20, 0
      %p41 = por %p39, %p40
      %p42 = scmp.ne.s32.totalorder %s28, %s29
      %p43 = scmp.eq.s32.totalorder %s21, 2
      %p44 = por %p42, %p43
      %p46 = scmp.ne.s32.totalorder %s29, %s45
      %p47 = scmp.eq.s32.totalorder %s21, 0
      %p48 = por %p46, %p47
      %s50 = sadd.s32 %s49, 1
      %p53 = scmp.eq.s32.totalorder %s15, 2
      %p54 = scmp.ne.s32.totalorder %s49, %s51
      %p55 = scmp.eq.s32.totalorder %s15, 0
      %p56 = por %p54, %p55
      %p57 = scmp.ne.s32.totalorder %s49, %s51
      %p58 = scmp.eq.s32.totalorder %s20, 2
      %p59 = por %p57, %p58
      %p60 = scmp.ne.s32.totalorder %s51, %s52
      %p61 = scmp.eq.s32.totalorder %s20, 0
      %p62 = por %p60, %p61
      %p63 = scmp.ne.s32.totalorder %s51, %s52
      %p64 = scmp.eq.s32.totalorder %s21, 2
      %p65 = por %p63, %p64
      %p67 = scmp.ne.s32.totalorder %s52, %s66
      %p68 = scmp.eq.s32.totalorder %s21, 0
      %p69 = por %p67, %p68
      %s71 = sadd.s32 %s70, 1
      %p74 = scmp.eq.s32.totalorder %s15, 2
      %p75 = scmp.ne.s32.totalorder %s70, %s72
      %p76 = scmp.eq.s32.totalorder %s15, 0
      %p77 = por %p75, %p76
      %p78 = scmp.ne.s32.totalorder %s70, %s72
      %p79 = scmp.eq.s32.totalorder %s20, 2
      %p80 = por %p78, %p79
      %p81 = scmp.ne.s32.totalorder %s72, %s73
      %p82 = scmp.eq.s32.totalorder %s20, 0
      %p83 = por %p81, %p82
      %p84 = scmp.ne.s32.totalorder %s72, %s73
      %p85 = scmp.eq.s32.totalorder %s21, 2
      %p86 = por %p84, %p85
      %p88 = scmp.ne.s32.totalorder %s73, %s87
      %p89 = scmp.eq.s32.totalorder %s21, 0
      %p90 = por %p88, %p89
      %s92 = sadd.s32 %s91, 1
      %p95 = scmp.eq.s32.totalorder %s15, 2
      %p96 = scmp.ne.s32.totalorder %s91, %s93
      %p97 = scmp.eq.s32.totalorder %s15, 0
      %p98 = por %p96, %p97
      %p99 = scmp.ne.s32.totalorder %s91, %s93
      %p100 = scmp.eq.s32.totalorder %s20, 2
      %p101 = por %p99, %p100
      %p102 = scmp.ne.s32.totalorder %s93, %s94
      %p103 = scmp.eq.s32.totalorder %s20, 0
      %p104 = por %p102, %p103
      %p105 = scmp.ne.s32.totalorder %s93, %s94
      %p106 = scmp.eq.s32.totalorder %s21, 2
      %p107 = por %p105, %p106
      %p109 = scmp.ne.s32.totalorder %s94, %s108
      %p110 = scmp.eq.s32.totalorder %s21, 0
      %p111 = por %p109, %p110
      %s113 = sadd.s32 %s112, 1
      %p116 = scmp.eq.s32.totalorder %s15, 2
      %p117 = scmp.ne.s32.totalorder %s112, %s114
      %p118 = scmp.eq.s32.totalorder %s15, 0
      %p119 = por %p117, %p118
      %p120 = scmp.ne.s32.totalorder %s112, %s114
      %p121 = scmp.eq.s32.totalorder %s20, 2
      %p122 = por %p120, %p121
      %p123 = scmp.ne.s32.totalorder %s114, %s115
      %p124 = scmp.eq.s32.totalorder %s20, 0
      %p125 = por %p123, %p124
      %p126 = scmp.ne.s32.totalorder %s114, %s115
      %p127 = scmp.eq.s32.totalorder %s21, 2
      %p128 = por %p126, %p127
      %p130 = scmp.ne.s32.totalorder %s115, %s129
      %p131 = scmp.eq.s32.totalorder %s21, 0
      %p132 = por %p130, %p131
      %s133 = ssub.s32 %s15, %s22
      %p134 = scmp.eq.s32.totalorder %s133, 0
      %s136 = sadd.s32 %s135, 1
      %s137 = scalar_select %p134, %s135, %s136
      %p140 = pneg %p134
      %p141 = scmp.eq.s32.totalorder %s15, 2
      %p142 = por %p140, %p141
      %p143 = scmp.ne.s32.totalorder %s135, %s138
      %p144 = scmp.eq.s32.totalorder %s15, 0
      %p145 = por %p143, %p144
      %p146 = scmp.ne.s32.totalorder %s135, %s138
      %p147 = scmp.eq.s32.totalorder %s20, 2
      %p148 = por %p146, %p147
      %p149 = scmp.ne.s32.totalorder %s138, %s139
      %p150 = scmp.eq.s32.totalorder %s20, 0
      %p151 = por %p149, %p150
      %p152 = scmp.ne.s32.totalorder %s138, %s139
      %p153 = scmp.eq.s32.totalorder %s21, 2
      %p154 = por %p152, %p153
      %p156 = scmp.ne.s32.totalorder %s139, %s155
      %p157 = scmp.eq.s32.totalorder %s21, 0
      %p158 = por %p156, %p157
      %p159 = scmp.le.s32.totalorder 1, %s15
      %p160 = scmp.lt.s32.totalorder %s15, 4
      %p161 = pnand %p159, %p160
      %p162 = pneg %p161
      // Predicated region
      $region9: #{tpu_custom_call.1} parent=5 // pred_check
        _
      $region10: #{tpu_custom_call.1} parent=5 // pred_check_branch
        %164 = sbr.rel (%p161) target = $region12
      $region11: #{tpu_custom_call.1} parent=5 // pred_region
        %s165 = ssub.s32 %s15, 1
        // Predicated region
        $region13: #{tpu_custom_call.1} parent=11 // pred_check
          %p166 = pneg %p62
        $region14: #{tpu_custom_call.1} parent=11 // pred_check_branch
          %168 = sbr.rel (%p166) target = $region16
        $region15: #{tpu_custom_call.1} parent=11 // pred_region
          _
        $region16: #{tpu_custom_call.1} parent=11 // pred_fallthru
          _
        // Predicated region
        $region17: #{tpu_custom_call.1} parent=11 // pred_check
          %p169 = pneg %p83
        $region18: #{tpu_custom_call.1} parent=11 // pred_check_branch
          %171 = sbr.rel (%p169) target = $region20
        $region19: #{tpu_custom_call.1} parent=11 // pred_region
          %s173 = ssub.s32 256, 256
          %174 = vsyncadd [#allocation4], %s173
          %s175 = sshll.u32 [#allocation3], 4
          %s176 = int_to_ptr.vmem [resolvable:$true] %s175
          %181 = dma.hbm_to_vmem [thread:$0]  %s2, 256, %s176, [#allocation4], 128, 128, 8
        $region20: #{tpu_custom_call.1} parent=11 // pred_fallthru
          _
        // Predicated region
        $region21: #{tpu_custom_call.1} parent=11 // pred_check
          %p182 = pneg %p104
        $region22: #{tpu_custom_call.1} parent=11 // pred_check_branch
          %184 = sbr.rel (%p182) target = $region24
        $region23: #{tpu_custom_call.1} parent=11 // pred_region
          _
        $region24: #{tpu_custom_call.1} parent=11 // pred_fallthru
          _
        // Predicated region
        $region25: #{tpu_custom_call.1} parent=11 // pred_check
          %p185 = pneg %p125
        $region26: #{tpu_custom_call.1} parent=11 // pred_check_branch
          %187 = sbr.rel (%p185) target = $region28
        $region27: #{tpu_custom_call.1} parent=11 // pred_region
          _
        $region28: #{tpu_custom_call.1} parent=11 // pred_fallthru
          _
      $region12: #{tpu_custom_call.1} parent=5 // pred_fallthru
        _
      %p188 = scmp.lt.s32.totalorder %s15, 3
      // Predicated region
      $region29: #{tpu_custom_call.1} parent=5 // pred_check
        %p189 = pneg %p188
      $region30: #{tpu_custom_call.1} parent=5 // pred_check_branch
        %191 = sbr.rel (%p189) target = $region32
      $region31: #{tpu_custom_call.1} parent=5 // pred_region
        // Predicated region
        $region33: #{tpu_custom_call.1} parent=31 // pred_check
          %p192 = pneg %p35
        $region34: #{tpu_custom_call.1} parent=31 // pred_check_branch
          %194 = sbr.rel (%p192) target = $region36
        $region35: #{tpu_custom_call.1} parent=31 // pred_region
          %s195 = sand.u32 %s25, 1
          %s196 = sand.u32 %s25, 1
          %s197 = smul.addr %s196, 40
          %s198 = scalar_lea.vmem [#allocation2], %s197
          %s199 = smul.addr %s15, 8
          %s200 = scalar_lea.vmem %s0, %s199
          // Predicated region
          $region37: #{tpu_custom_call.1} parent=35 // pred_check
            _
          $region38: #{tpu_custom_call.1} parent=35 // pred_check_branch
            %202 = sbr.rel (0) target = $region40
          $region39: #{tpu_custom_call.1} parent=35 // pred_region
            // Predicated region
            $region41: #{tpu_custom_call.1} parent=39 // pred_check
              _
            $region42: #{tpu_custom_call.1} parent=39 // pred_check_branch
              %204 = sbr.rel (0) target = $region44
            $region43: #{tpu_custom_call.1} parent=39 // pred_region
              // Predicated region
              $region56: #{tpu_custom_call.1} parent=43 // pred_check
                _
              $region57: #{tpu_custom_call.1} parent=43 // pred_check_branch
                %228 = sbr.rel (0) target = $region59
              $region58: #{tpu_custom_call.1} parent=43 // pred_region
                loop: start=0, step=1, limit=1
                $region60: #{tpu_custom_call.1} parent=58 // loop_pre_header
                  _
                $region61: #{tpu_custom_call.1} parent=58 // loop_header
                  %s230 = sphi 0, %s234
                  %p231 = scmp.ge.s32.totalorder %s230, 1
                  %s235 = sphi %s200, %s200
                  %s236 = sphi %s198, %s198
                $region62: #{tpu_custom_call.1} parent=58 // loop_header_branch
                  %233 = sbr.rel (%p231) target = $region66
                $region63: #{tpu_custom_call.1} parent=58 // loop_body
                  %v237 = vld [vmem:[%s235] sm:$0xff]
                  %238 = vst [vmem:[%s236] sm:$0xff] %v237
                  %v239 = vld [vmem:[%s235 + $0x18] sm:$0xff]
                  %240 = vst [vmem:[%s236 + $0x8] sm:$0xff] %v239
                  %v241 = vld [vmem:[%s235 + $0x30] sm:$0xff]
                  %242 = vst [vmem:[%s236 + $0x10] sm:$0xff] %v241
                  %v243 = vld [vmem:[%s235 + $0x48] sm:$0xff]
                  %244 = vst [vmem:[%s236 + $0x18] sm:$0xff] %v243
                  %v245 = vld [vmem:[%s235 + $0x60] sm:$0xff]
                  %246 = vst [vmem:[%s236 + $0x20] sm:$0xff] %v245
                $region64: #{tpu_custom_call.1} parent=58 // loop_footer
                  %s234 = sadd.s32 1, %s230
                $region65: #{tpu_custom_call.1} parent=58 // loop_footer_branch
                  %229 = sbr.rel target = $region61
                $region66: #{tpu_custom_call.1} parent=58 // loop_exit
                  _
              $region59: #{tpu_custom_call.1} parent=43 // pred_fallthru
                _
              // Predicated region
              $region67: #{tpu_custom_call.1} parent=43 // pred_check
                _
              $region68: #{tpu_custom_call.1} parent=43 // pred_check_branch
                %248 = sbr.rel target = $region70
              $region69: #{tpu_custom_call.1} parent=43 // pred_region
                _
              $region70: #{tpu_custom_call.1} parent=43 // pred_fallthru
                _
            $region44: #{tpu_custom_call.1} parent=39 // pred_fallthru
              _
            // Predicated region
            $region45: #{tpu_custom_call.1} parent=39 // pred_check
              _
            $region46: #{tpu_custom_call.1} parent=39 // pred_check_branch
              %206 = sbr.rel target = $region48
            $region47: #{tpu_custom_call.1} parent=39 // pred_region
              %s208 = ssub.s32 256, 1
              loop: start=0, step=1, limit=1
              $region49: #{tpu_custom_call.1} parent=47 // loop_pre_header
                _
              $region50: #{tpu_custom_call.1} parent=47 // loop_header
                %s210 = sphi 0, %s214
                %p211 = scmp.ge.s32.totalorder %s210, 1
                %s215 = sphi %s200, %s200
                %s216 = sphi %s198, %s198
              $region51: #{tpu_custom_call.1} parent=47 // loop_header_branch
                %213 = sbr.rel (%p211) target = $region55
              $region52: #{tpu_custom_call.1} parent=47 // loop_body
                %v217 = vld [vmem:[%s215] sm:%s208]
                %218 = vst [vmem:[%s216] sm:%s208] %v217
                %v219 = vld [vmem:[%s215 + $0x18] sm:%s208]
                %220 = vst [vmem:[%s216 + $0x8] sm:%s208] %v219
                %v221 = vld [vmem:[%s215 + $0x30] sm:%s208]
                %222 = vst [vmem:[%s216 + $0x10] sm:%s208] %v221
                %v223 = vld [vmem:[%s215 + $0x48] sm:%s208]
                %224 = vst [vmem:[%s216 + $0x18] sm:%s208] %v223
                %v225 = vld [vmem:[%s215 + $0x60] sm:%s208]
                %226 = vst [vmem:[%s216 + $0x20] sm:%s208] %v225
              $region53: #{tpu_custom_call.1} parent=47 // loop_footer
                %s214 = sadd.s32 1, %s210
              $region54: #{tpu_custom_call.1} parent=47 // loop_footer_branch
                %209 = sbr.rel target = $region50
              $region55: #{tpu_custom_call.1} parent=47 // loop_exit
                _
            $region48: #{tpu_custom_call.1} parent=39 // pred_fallthru
              _
          $region40: #{tpu_custom_call.1} parent=35 // pred_fallthru
            _
          %249 = vnop
        $region36: #{tpu_custom_call.1} parent=31 // pred_fallthru
          _
      $region32: #{tpu_custom_call.1} parent=5 // pred_fallthru
        _
      %p250 = scmp.le.s32.totalorder 1, %s15
      %p251 = scmp.lt.s32.totalorder %s15, 4
      %p252 = pnand %p250, %p251
      %p253 = pneg %p252
      // Predicated region
      $region71: #{tpu_custom_call.1} parent=5 // pred_check
        _
      $region72: #{tpu_custom_call.1} parent=5 // pred_check_branch
        %255 = sbr.rel (%p252) target = $region74
      $region73: #{tpu_custom_call.1} parent=5 // pred_region
        %s256 = ssub.s32 %s15, 1
        %s257 = sand.u32 %s28, 1
        %s258 = sand.u32 %s28, 1
        %s259 = smul.addr %s258, 40
        %s260 = scalar_lea.vmem [#allocation2], %s259
        // Predicated region
        $region75: #{tpu_custom_call.1} parent=73 // pred_check
          %p261 = pneg %p41
        $region76: #{tpu_custom_call.1} parent=73 // pred_check_branch
          %263 = sbr.rel (%p261) target = $region78
        $region77: #{tpu_custom_call.1} parent=73 // pred_region
          _
        $region78: #{tpu_custom_call.1} parent=73 // pred_fallthru
          _
        // Predicated region
        $region79: #{tpu_custom_call.1} parent=73 // pred_check
          %p264 = pneg %p83
        $region80: #{tpu_custom_call.1} parent=73 // pred_check_branch
          %266 = sbr.rel (%p264) target = $region82
        $region81: #{tpu_custom_call.1} parent=73 // pred_region
          %267 = dma.done [#allocation4], 256
        $region82: #{tpu_custom_call.1} parent=73 // pred_fallthru
          _
        %s268 = sand.u32 %s28, 1
        %s269 = sand.u32 %s28, 1
        %s270 = smul.addr %s269, 40
        %s271 = scalar_lea.vmem [#allocation2], %s270
        %p272 = pneg %p41
        %p273 = pneg %p38
        %p274 = pneg %p62
        %p275 = pneg %p59
        %p276 = pneg %p83
        %p277 = pneg %p80
        %p278 = pneg %p104
        %p279 = pneg %p101
        %p280 = pneg %p125
        %p281 = pneg %p122
        %p282 = pneg %p151
        %p283 = pneg %p148
        %s284 = sand.u32 %s138, 1
        %s285 = scalar_lea.sflag [#allocation5], %s284
        %s286 = sand.u32 %s138, 1
        %s287 = scalar_lea.vmem [#allocation6], %s286
        %v288 = vld [vmem:[%s260] sm:$0xff]
        %v289 = vld [vmem:[%s260 + $0x8] sm:$0xff]
        %v290 = vld [vmem:[%s260 + $0x10] sm:$0xff]
        %v291 = vld [vmem:[%s260 + $0x18] sm:$0xff]
        %v292 = vld [vmem:[%s260 + $0x20] sm:$0xff]
        %v293 = vld [vmem:[%s1] sm:$0xff]
        %v294 = vld [vmem:[%s1 + $0x8] sm:$0xff]
        %v295 = vld [vmem:[%s1 + $0x10] sm:$0xff]
        %v296 = vld [vmem:[%s1 + $0x18] sm:$0xff]
        %v297 = vld [vmem:[%s1 + $0x20] sm:$0xff]
        %v298 = vld [vmem:[%s1 + $0x28] sm:$0x1]
        %vm299 = vcmask 326656
        %v301 = vsel %vm299, %v293, 0
        %v304 = vsel %vm299, %v294, 0
        %v307 = vsel %vm299, %v295, 0
        %v310 = vsel %vm299, %v296, 0
        %v313 = vsel %vm299, %v297, 0
        %v316 = vsel %vm299, %v298, 0
        %318 = vmatprep.subr.mxu0 0.0
        %319 = vmatpush1.msra.mxu0 0.0
        %320 = vmatprep.subr.mxu0 0.0
        %321 = vmatpush1.msra.mxu0 0.0
        %322 = vmatprep.subr.mxu0 0.0
        %323 = vmatpush1.msra.mxu0 0.0
        %324 = vmatprep.subr.mxu0 0.0
        %325 = vmatpush1.msra.mxu0 0.0
        %326 = vmatprep.subr.mxu0 0.0
        %327 = vmatpush1.msra.mxu0 0.0
        %328 = vmatprep.subr.mxu0 0.0
        %329 = vmatpush1.msra.mxu0 0.0
        %330 = vmatprep.subr.mxu0 0.0
        %331 = vmatpush1.msra.mxu0 0.0
        %332 = vmatprep.subr.mxu0 0.0
        %333 = vmatpush1.msra.mxu0 0.0
        %334 = vmatprep.subr.mxu0 0.0
        %335 = vmatpush1.msra.mxu0 0.0
        %336 = vmatprep.subr.mxu0 0.0
        %337 = vmatpush1.msra.mxu0 0.0
        %338 = vmatprep.subr.mxu0 0.0
        %339 = vmatpush1.msra.mxu0 0.0
        %340 = vmatprep.subr.mxu0 0.0
        %341 = vmatpush1.msra.mxu0 %v292
        %342 = vmatprep.subr.mxu0 0.0
        %343 = vmatpush1.msra.mxu0 %v291
        %344 = vmatprep.subr.mxu0 0.0
        %345 = vmatpush1.msra.mxu0 %v290
        %346 = vmatprep.subr.mxu0 0.0
        %347 = vmatpush1.msra.mxu0 %v289
        %348 = vmatprep.subr.mxu0 0.0
        %349 = vmatpush1.msra.mxu0 %v288
        %350 = vmatprep.subr.mxu0 0.0
        %351 = vmatpush2.msra.mxu0 0.0
        %352 = vmatprep.subr.mxu0 0.0
        %353 = vmatpush2.msra.mxu0 0.0
        %354 = vmatprep.subr.mxu0 0.0
        %355 = vmatpush2.msra.mxu0 0.0
        %356 = vmatprep.subr.mxu0 0.0
        %357 = vmatpush2.msra.mxu0 0.0
        %358 = vmatprep.subr.mxu0 0.0
        %359 = vmatpush2.msra.mxu0 0.0
        %360 = vmatprep.subr.mxu0 0.0
        %361 = vmatpush2.msra.mxu0 0.0
        %362 = vmatprep.subr.mxu0 0.0
        %363 = vmatpush2.msra.mxu0 0.0
        %364 = vmatprep.subr.mxu0 0.0
        %365 = vmatpush2.msra.mxu0 0.0
        %366 = vmatprep.subr.mxu0 0.0
        %367 = vmatpush2.msra.mxu0 0.0
        %368 = vmatprep.subr.mxu0 0.0
        %369 = vmatpush2.msra.mxu0 0.0
        %370 = vmatprep.subr.mxu0 0.0
        %371 = vmatpush2.msra.mxu0 0.0
        %372 = vmatprep.subr.mxu0 0.0
        %373 = vmatpush2.msra.mxu0 0.0
        %374 = vmatprep.subr.mxu0 0.0
        %375 = vmatpush2.msra.mxu0 0.0
        %376 = vmatprep.subr.mxu0 0.0
        %377 = vmatpush2.msra.mxu0 0.0
        %378 = vmatprep.subr.mxu0 0.0
        %379 = vmatpush2.msra.mxu0 0.0
        %380 = vmatprep.subr.mxu0 0.0
        %381 = vmatpush2.msra.mxu0 0.0
        %382 = vmatprep.mubr.f32.mxu0 0.0
        %383 = vmatmul.mubr.f32.gmra.mxu0 %v301
        %v384 = vpop.f32.mrf.mxu0
        %v385 = vadd.f32 0.0, %v384
        %v386 = vpop.f32.mrf.mxu0
        %387 = vmatprep.mubr.f32.mxu0 0.0
        %388 = vmatmul.mubr.f32.gmra.mxu0 %v304
        %v389 = vpop.f32.mrf.mxu0
        %v390 = vadd.f32 0.0, %v389
        %v391 = vpop.f32.mrf.mxu0
        %392 = vmatprep.mubr.f32.mxu0 0.0
        %393 = vmatmul.mubr.f32.gmra.mxu0 %v307
        %v394 = vpop.f32.mrf.mxu0
        %v395 = vadd.f32 0.0, %v394
        %v396 = vpop.f32.mrf.mxu0
        %397 = vmatprep.mubr.f32.mxu0 0.0
        %398 = vmatmul.mubr.f32.gmra.mxu0 %v310
        %v399 = vpop.f32.mrf.mxu0
        %v400 = vadd.f32 0.0, %v399
        %v401 = vpop.f32.mrf.mxu0
        %402 = vmatprep.mubr.f32.mxu0 0.0
        %403 = vmatmul.mubr.f32.gmra.mxu0 %v313
        %v404 = vpop.f32.mrf.mxu0
        %v405 = vadd.f32 0.0, %v404
        %v406 = vpop.f32.mrf.mxu0
        %407 = vmatprep.mubr.f32.mxu0 0.0
        %408 = vmatmul.mubr.f32.gmra.mxu0 %v316
        %v409 = vpop.f32.mrf.mxu0
        %v410 = vadd.f32 0.0, %v409
        %v411 = vpop.f32.mrf.mxu0
        %412 = vdwg.mxu0
        %v413 = vmax.f32 %v385, 0.0
        %v414 = vmax.f32 %v390, 0.0
        %v415 = vmax.f32 %v395, 0.0
        %v416 = vmax.f32 %v400, 0.0
        %v417 = vmul.f32 %v288, %v288
        %v418 = vmul.f32 %v289, %v289
        %v419 = vmul.f32 %v290, %v290
        %v420 = vmul.f32 %v291, %v291
        %v421 = vadd.f32 %v417, %v418
        %v422 = vadd.f32 %v421, %v419
        %v423 = vadd.f32 %v422, %v420
        %v424 = vrot.slane %v423, 4
        %v425 = vadd.f32 %v423, %v424
        %v426 = vrot.slane %v425, 2
        %v427 = vadd.f32 %v425, %v426
        %v428 = vrot.slane %v427, 1
        %v429 = vadd.f32 %v427, %v428
        %v430 = vmul.f32 %v405, %v405
        %v431 = vrot.slane %v430, 4
        %v432 = vadd.f32 %v430, %v431
        %v433 = vrot.slane %v432, 2
        %v434 = vadd.f32 %v432, %v433
        %v435 = vrot.slane %v434, 1
        %v436 = vadd.f32 %v434, %v435
        %v437 = vsub.f32 %v436, %v429
        %v438 = vmul.f32 %v437, 0.5
        %v439 = vld [vmem:[#allocation3] sm:$0xff]
        %v440 = vld [vmem:[#allocation3 + $0x8] sm:$0xff]
        %v441 = vld [vmem:[%s3] sm:$0xff]
        %v442 = vld [vmem:[%s3 + $0x8] sm:$0xff]
        %444 = vset.pattern.permute.xlu0 0
        %445 = vperm.xlu0 %444, %v441
        %v446 = vpop.permute.xlu0 %445
        %449 = vset.pattern.permute.xlu0 0
        %450 = vperm.xlu0 %449, %v442
        %v451 = vpop.permute.xlu0 %450
        %vm453 = vcmask 261120
        %v455 = vsel %vm453, %v439, 0
        %v458 = vsel %vm453, %v440, 0
        %460 = vmatprep.subr.mxu0 0.0
        %461 = vmatpush1.msra.mxu0 0.0
        %462 = vmatprep.subr.mxu0 0.0
        %463 = vmatpush1.msra.mxu0 0.0
        %464 = vmatprep.subr.mxu0 0.0
        %465 = vmatpush1.msra.mxu0 0.0
        %466 = vmatprep.subr.mxu0 0.0
        %467 = vmatpush1.msra.mxu0 0.0
        %468 = vmatprep.subr.mxu0 0.0
        %469 = vmatpush1.msra.mxu0 0.0
        %470 = vmatprep.subr.mxu0 0.0
        %471 = vmatpush1.msra.mxu0 0.0
        %472 = vmatprep.subr.mxu0 0.0
        %473 = vmatpush1.msra.mxu0 0.0
        %474 = vmatprep.subr.mxu0 0.0
        %475 = vmatpush1.msra.mxu0 0.0
        %476 = vmatprep.subr.mxu0 0.0
        %477 = vmatpush1.msra.mxu0 0.0
        %478 = vmatprep.subr.mxu0 0.0
        %479 = vmatpush1.msra.mxu0 0.0
        %480 = vmatprep.subr.mxu0 0.0
        %481 = vmatpush1.msra.mxu0 0.0
        %482 = vmatprep.subr.mxu0 0.0
        %483 = vmatpush1.msra.mxu0 0.0
        %484 = vmatprep.subr.mxu0 0.0
        %485 = vmatpush1.msra.mxu0 %v416
        %486 = vmatprep.subr.mxu0 0.0
        %487 = vmatpush1.msra.mxu0 %v415
        %488 = vmatprep.subr.mxu0 0.0
        %489 = vmatpush1.msra.mxu0 %v414
        %490 = vmatprep.subr.mxu0 0.0
        %491 = vmatpush1.msra.mxu0 %v413
        %492 = vmatprep.subr.mxu0 0.0
        %493 = vmatpush2.msra.mxu0 0.0
        %494 = vmatprep.subr.mxu0 0.0
        %495 = vmatpush2.msra.mxu0 0.0
        %496 = vmatprep.subr.mxu0 0.0
        %497 = vmatpush2.msra.mxu0 0.0
        %498 = vmatprep.subr.mxu0 0.0
        %499 = vmatpush2.msra.mxu0 0.0
        %500 = vmatprep.subr.mxu0 0.0
        %501 = vmatpush2.msra.mxu0 0.0
        %502 = vmatprep.subr.mxu0 0.0
        %503 = vmatpush2.msra.mxu0 0.0
        %504 = vmatprep.subr.mxu0 0.0
        %505 = vmatpush2.msra.mxu0 0.0
        %506 = vmatprep.subr.mxu0 0.0
        %507 = vmatpush2.msra.mxu0 0.0
        %508 = vmatprep.subr.mxu0 0.0
        %509 = vmatpush2.msra.mxu0 0.0
        %510 = vmatprep.subr.mxu0 0.0
        %511 = vmatpush2.msra.mxu0 0.0
        %512 = vmatprep.subr.mxu0 0.0
        %513 = vmatpush2.msra.mxu0 0.0
        %514 = vmatprep.subr.mxu0 0.0
        %515 = vmatpush2.msra.mxu0 0.0
        %516 = vmatprep.subr.mxu0 0.0
        %517 = vmatpush2.msra.mxu0 0.0
        %518 = vmatprep.subr.mxu0 0.0
        %519 = vmatpush2.msra.mxu0 0.0
        %520 = vmatprep.subr.mxu0 0.0
        %521 = vmatpush2.msra.mxu0 0.0
        %522 = vmatprep.subr.mxu0 0.0
        %523 = vmatpush2.msra.mxu0 0.0
        %524 = vmatprep.mubr.f32.mxu0 0.0
        %525 = vmatmul.mubr.f32.gmra.mxu0 %v455
        %v526 = vpop.f32.mrf.mxu0
        %v527 = vadd.f32 %v446, %v526
        %v528 = vpop.f32.mrf.mxu0
        %529 = vmatprep.mubr.f32.mxu0 0.0
        %530 = vmatmul.mubr.f32.gmra.mxu0 %v458
        %v531 = vpop.f32.mrf.mxu0
        %v532 = vadd.f32 %v451, %v531
        %v533 = vpop.f32.mrf.mxu0
        %534 = vdwg.mxu0
        %v535 = vmax.f32 %v527, 0.0
        %v536 = vmax.f32 %v532, 0.0
        %v537 = vld [vmem:[%s4] sm:$0xff]
        %v538 = vld [vmem:[%s4 + $0x8] sm:$0xff]
        %540 = vset.pattern.permute.xlu0 0
        %541 = vperm.xlu0 %540, %v537
        %v542 = vpop.permute.xlu0 %541
        %545 = vset.pattern.permute.xlu0 0
        %546 = vperm.xlu0 %545, %v538
        %v547 = vpop.permute.xlu0 %546
        %v549 = vmul.f32 %v535, %v542
        %v550 = vmul.f32 %v536, %v547
        %v551 = vadd.f32 %v549, %v550
        %v552 = vrot.slane %v551, 4
        %v553 = vadd.f32 %v551, %v552
        %v554 = vrot.slane %v553, 2
        %v555 = vadd.f32 %v553, %v554
        %v556 = vrot.slane %v555, 1
        %v557 = vadd.f32 %v555, %v556
        %v558 = vadd.f32 %v410, %v438
        %v559 = vadd.f32 %v558, %v557
        %v560 = vxor.u32 %v559, 2147483648
        %v561 = vmul.f32 %v560, 1.442695
        %v562 = vpow.pop %v561
        %v563 = vadd.f32 %v562, 1.0
        %v564 = vrcp.pop %v563
        %v565 = vmul.f32 1.0, %v564
        %566 = vst [vmem:[%s287] sm:$0x1] %v565
        %s567 = sand.u32 %s138, 1
        %s568 = scalar_lea.sflag [#allocation5], %s567
        %s569 = sand.u32 %s138, 1
        %s570 = scalar_lea.vmem [#allocation6], %s569
        // Predicated region
        $region83: #{tpu_custom_call.1} parent=73 // pred_check
          %p571 = pneg %p148
        $region84: #{tpu_custom_call.1} parent=73 // pred_check_branch
          %573 = sbr.rel (%p571) target = $region86
        $region85: #{tpu_custom_call.1} parent=73 // pred_region
          %s575 = ssub.s32 16, 16
          %576 = vsyncadd %s568, %s575
          %s577 = smul.addr %s20, 16
          %s578 = scalar_lea.hbm %s5, %s577
          %s580 = sshll.u32 %s570, 4
          %s581 = int_to_ptr.vmem [resolvable:$true] %s580
          %583 = dma.vmem_to_hbm [thread:$0]  %s581, 16, %s578, %s568
        $region86: #{tpu_custom_call.1} parent=73 // pred_fallthru
          _
      $region74: #{tpu_custom_call.1} parent=5 // pred_fallthru
        _
      %p584 = scmp.le.s32.totalorder 2, %s15
      // Predicated region
      $region87: #{tpu_custom_call.1} parent=5 // pred_check
        %p585 = pneg %p584
      $region88: #{tpu_custom_call.1} parent=5 // pred_check_branch
        %587 = sbr.rel (%p585) target = $region90
      $region89: #{tpu_custom_call.1} parent=5 // pred_region
        %s588 = ssub.s32 %s15, 2
        // Predicated region
        $region91: #{tpu_custom_call.1} parent=89 // pred_check
          %p589 = pneg %p154
        $region92: #{tpu_custom_call.1} parent=89 // pred_check_branch
          %591 = sbr.rel (%p589) target = $region94
        $region93: #{tpu_custom_call.1} parent=89 // pred_region
          %s592 = sand.u32 %s139, 1
          %s593 = scalar_lea.sflag [#allocation5], %s592
          %s594 = sand.u32 %s139, 1
          %s595 = scalar_lea.vmem [#allocation6], %s594
          %596 = dma.done %s593, 16
        $region94: #{tpu_custom_call.1} parent=89 // pred_fallthru
          _
      $region90: #{tpu_custom_call.1} parent=5 // pred_fallthru
        _
    $region6: #{tpu_custom_call.1} parent=1 // loop_footer
      %s19 = sadd.s32 1, %s15
    $region7: #{tpu_custom_call.1} parent=1 // loop_footer_branch
      %14 = sbr.rel target = $region3
    $region8: #{tpu_custom_call.1} parent=1 // loop_exit
      _
    %597 = vsyncpa [#allocation4], 1
    %s598 = scalar_lea.sflag [#allocation4], 1
    %599 = vsyncpa %s598, 1
    %600 = vsyncpa [#allocation5], 1
    %s601 = scalar_lea.sflag [#allocation5], 1
    %602 = vsyncpa %s601, 1

</llo_original>
